<compile_context>
chip_gen: v7x
topology: tpu7x:2x2x1
jax: 0.10.0
libtpu: 0.0.40
codegen_flags: <defaults>
</compile_context>

<pallas_src>
import jax
import jax.numpy as jnp
from jax.experimental import pallas as pl
from jax.experimental.pallas import tpu as pltpu


# --------------------------------------------------------------------------- #
# Kernel: one batch tile; every layer is a single 2-D matmul on the MXU.
# --------------------------------------------------------------------------- #
def _cnn_kernel(x_ref, w1_ref, b1_ref, w2_ref, b2_ref,
                fc1w_ref, fc1b_ref, fc2w_ref, fc2b_ref, out_ref):
    f32 = jnp.float32
    cdt = w1_ref.dtype                                        # MXU compute dtype (bf16)

    x = x_ref[...]                                            # (TB, F)

    # conv1 ("same", pad=1) + bias + ReLU, with the first max-pool folded into
    # the weights: the two N-halves are the even / odd pooling positions.
    a1 = jnp.dot(x, w1_ref[...], preferred_element_type=f32) + b1_ref[...]
    a1 = jnp.maximum(a1, 0.0)                                 # (TB, 2*L2*C1)
    n1 = a1.shape[-1] // 2
    h1 = jnp.maximum(a1[:, :n1], a1[:, n1:]).astype(cdt)      # (TB, L2*C1)

    # conv2 + bias + ReLU + folded max-pool
    a2 = jnp.dot(h1, w2_ref[...], preferred_element_type=f32) + b2_ref[...]
    a2 = jnp.maximum(a2, 0.0)                                 # (TB, 2*L3*C2)
    n2 = a2.shape[-1] // 2
    h2 = jnp.maximum(a2[:, :n2], a2[:, n2:]).astype(cdt)      # (TB, L3*C2)

    # fc1 + ReLU (torch channel-major flatten folded into the weight); f32 out.
    h3 = jnp.dot(h2, fc1w_ref[...], preferred_element_type=f32) + fc1b_ref[...]
    h3 = jnp.maximum(h3, 0.0)                                 # (TB, H)

    # fc2 + sigmoid kept in f32; result produced lane-dense (batch in lanes).
    z = jax.lax.dot_general(fc2w_ref[...], h3, (((1,), (1,)), ((), ())),
                            preferred_element_type=f32)       # (1, TB)
    z = z + fc2b_ref[...]
    out_ref[...] = (1.0 / (1.0 + jnp.exp(-z)))[None]          # (1, 1, TB)


# --------------------------------------------------------------------------- #
# Wrapper-side constant matrices (derived from parameters only, built ONCE).
# --------------------------------------------------------------------------- #
def _banded_conv_weight(w, length):
    """w: (Cout, Cin, 3) -> (length*Cin, length*Cout) banded matrix so that
    `act @ band` is a zero-padded 'same' conv1d (k=3, pad=1) for activations
    laid out position-major / channel-minor (lane = pos*Cin + c)."""
    cout, cin, ksize = w.shape
    row = jnp.arange(length * cin)
    col = jnp.arange(length * cout)
    lp, c = row // cin, row % cin             # input position / input channel
    l, o = col // cout, col % cout            # output position / output channel
    k = lp[:, None] - l[None, :] + 1          # tap index
    valid = (k >= 0) & (k <= ksize - 1)
    vals = w[o[None, :], c[:, None], jnp.clip(k, 0, ksize - 1)]
    return jnp.where(valid, vals, 0.0).astype(jnp.float32)


def _fold_maxpool2(band, bias, length, cout):
    """Fold the non-overlapping window-2 max-pool into the conv's banded weight.

    Equivalent to right-multiplying by the 0/1 even/odd column selectors (exact
    because ReLU commutes with non-negative column selection).  Even and odd
    halves are concatenated along N so each conv+pool stage is one matmul
    followed by a lane-aligned split + max inside the kernel.
    """
    rows = band.shape[0]
    half = (length // 2) * cout
    br = band.reshape(rows, length // 2, 2, cout)
    w_eo = jnp.concatenate(
        [br[:, :, 0, :].reshape(rows, half), br[:, :, 1, :].reshape(rows, half)],
        axis=1)
    bf = jnp.tile(bias, length).reshape(length // 2, 2, cout)
    b_eo = jnp.concatenate(
        [bf[:, 0, :].reshape(1, half), bf[:, 1, :].reshape(1, half)], axis=1)
    return w_eo, b_eo


def _build_constants(params, num_features, compute_dtype):
    w1, b1, w2, b2, fc1w, fc1b, fc2w, fc2b = params
    F = num_features
    C1, C2, H = w1.shape[0], w2.shape[0], fc1w.shape[0]
    L2, L3 = F // 2, F // 4

    w1eo, b1eo = _fold_maxpool2(_banded_conv_weight(w1, F), b1, F, C1)
    w2eo, b2eo = _fold_maxpool2(_banded_conv_weight(w2, L2), b2, L2, C2)
    # torch .view(B, -1) is channel-major (flat = c*L3 + l); kernel lanes are l*C2 + c.
    fc1wk = jnp.transpose(fc1w.reshape(H, C2, L3), (2, 1, 0)).reshape(L3 * C2, H)

    return dict(
        w1eo=w1eo.astype(compute_dtype), b1eo=b1eo.astype(jnp.float32),
        w2eo=w2eo.astype(compute_dtype), b2eo=b2eo.astype(jnp.float32),
        fc1w=fc1wk.astype(compute_dtype), fc1b=fc1b.reshape(1, H).astype(jnp.float32),
        fc2w=fc2w.reshape(1, H).astype(jnp.float32),
        fc2b=fc2b.reshape(1, 1).astype(jnp.float32),
    )


def _pick_tb(B, F):
    """Batch tile = MXU M dimension and the lane width of the output block.
    >=2 tiles whenever B > 128 (so the 'parallel' axis can occupy v7x's two
    TensorCores); larger tiles when F is small (weights/activations tiny)."""
    cap = 1024 if F <= 64 else (256 if F <= 512 else 128)
    if B <= 128:
        return 128
    half = -(-B // 2)
    return max(128, min(cap, ((half + 127) // 128) * 128))


def _vmem_limit_bytes(tb, F, C1, C2, H, wbytes):
    L2, L3 = F // 2, F // 4
    n1, n2 = 2 * L2 * C1, 2 * L3 * C2
    weights = (F * n1 + (L2 * C1) * n2 + (L3 * C2) * H) * wbytes \
              + (n1 + n2 + 2 * H + 2) * 4                  # single-buffered consts
    x_in = 2 * tb * F * wbytes                             # double-buffered input
    y_out = 2 * tb * 4                                     # double-buffered output
    acts = tb * (n1 + L2 * C1 + n2 + L3 * C2 + 2 * H) * 4  # live f32 temporaries
    budget = int(1.5 * (weights + x_in + y_out + acts)) + (2 << 20)
    # Never below the v6e/v7x default scoped limit; never above v7x's 64 MiB
    # physical VMEM (smallest across generations).
    return max(32 << 20, min(budget, 64 << 20))


def make_cnn_forward(params, num_features, *, compute_dtype=jnp.bfloat16, tb=None):
    """Build a jitted forward: x (B, num_features) -> sigmoid probabilities (B,).
    All parameter-derived constant matrices are built once here."""
    F = num_features
    assert F % 4 == 0, "num_features must be divisible by 4"
    w1, _, w2, _, fc1w, *_ = params
    C1, C2, H = w1.shape[0], w2.shape[0], fc1w.shape[0]
    c = _build_constants(params, F, compute_dtype)
    wbytes = jnp.dtype(compute_dtype).itemsize

    def _const_spec(shape):
        nd = len(shape)
        # Constant operands: same block every grid step -> single-buffer them.
        return pl.BlockSpec(shape, lambda i, _nd=nd: (0,) * _nd,
                            pipeline_mode=pl.Buffered(1))

    @jax.jit
    def forward(x):
        B = x.shape[0]
        tile = tb if tb is not None else _pick_tb(B, F)
        n_tiles = pl.cdiv(B, tile)
        b_pad = n_tiles * tile
        x_p = jnp.pad(x, ((0, b_pad - B), (0, 0))).astype(compute_dtype)

        out = pl.pallas_call(
            _cnn_kernel,
            out_shape=jax.ShapeDtypeStruct((n_tiles, 1, tile), jnp.float32),
            grid=(n_tiles,),
            in_specs=[
                pl.BlockSpec((tile, F), lambda i: (i, 0)),        # per-tile input
                _const_spec(c['w1eo'].shape), _const_spec(c['b1eo'].shape),
                _const_spec(c['w2eo'].shape), _const_spec(c['b2eo'].shape),
                _const_spec(c['fc1w'].shape), _const_spec(c['fc1b'].shape),
                _const_spec(c['fc2w'].shape), _const_spec(c['fc2b'].shape),
            ],
            out_specs=pl.BlockSpec((1, 1, tile), lambda i: (i, 0, 0)),
            compiler_params=pltpu.CompilerParams(
                dimension_semantics=("parallel",),
                vmem_limit_bytes=_vmem_limit_bytes(tile, F, C1, C2, H, wbytes)),
        )(x_p, c['w1eo'], c['b1eo'], c['w2eo'], c['b2eo'],
          c['fc1w'], c['fc1b'], c['fc2w'], c['fc2b'])

        return out.reshape(b_pad)[:B]

    return forward


# --------------------------------------------------------------------------- #
# Parameter init (matches the nn.Module's shapes) and a plain-JAX reference.
# --------------------------------------------------------------------------- #
def init_params(key, num_features):
    ks = jax.random.split(key, 8)
    l3 = num_features // 4
    w1 = 0.30 * jax.random.normal(ks[0], (16, 1, 3), jnp.float32)    # Conv1d(1, 16, 3)
    b1 = 0.10 * jax.random.normal(ks[1], (16,), jnp.float32)
    w2 = 0.10 * jax.random.normal(ks[2], (32, 16, 3), jnp.float32)   # Conv1d(16, 32, 3)
    b2 = 0.10 * jax.random.normal(ks[3], (32,), jnp.float32)
    fc1w = 0.05 * jax.random.normal(ks[4], (64, 32 * l3), jnp.float32)
    fc1b = 0.10 * jax.random.normal(ks[5], (64,), jnp.float32)
    fc2w = 0.10 * jax.random.normal(ks[6], (1, 64), jnp.float32)
    fc2b = 0.10 * jax.random.normal(ks[7], (1,), jnp.float32)
    return (w1, b1, w2, b2, fc1w, fc1b, fc2w, fc2b)


def reference_forward(x, params):
    """Plain-JAX f32 re-implementation of the PyTorch forward (validation only)."""
    w1, b1, w2, b2, fc1w, fc1b, fc2w, fc2b = params
    B, F = x.shape

    def conv1d_same(h, w, b):
        L = h.shape[2]
        hp = jnp.pad(h, ((0, 0), (0, 0), (1, 1)))
        patches = jnp.stack([hp[:, :, k:k + L] for k in range(3)], axis=-1)  # (B,Ci,L,3)
        return jnp.einsum('bclk,ock->bol', patches, w,
                          precision=jax.lax.Precision.HIGHEST) + b[None, :, None]

    h = x[:, None, :]                                        # (B, 1, F)
    h = jax.nn.relu(conv1d_same(h, w1, b1))                  # (B, 16, F)
    h = jnp.maximum(h[:, :, 0::2], h[:, :, 1::2])            # (B, 16, F//2)
    h = jax.nn.relu(conv1d_same(h, w2, b2))                  # (B, 32, F//2)
    h = jnp.maximum(h[:, :, 0::2], h[:, :, 1::2])            # (B, 32, F//4)
    flat = h.reshape(B, -1)                                  # channel-major, like torch .view
    h = jax.nn.relu(flat @ fc1w.T + fc1b)
    z = h @ fc2w.T + fc2b
    return jax.nn.sigmoid(z)[:, 0]


if __name__ == "__main__":
    B, NUM_FEATURES = 2, 16
    key = jax.random.PRNGKey(0)
    pkey, xkey = jax.random.split(key)
    params = init_params(pkey, NUM_FEATURES)
    x = jax.random.normal(xkey, (B, NUM_FEATURES), jnp.float32)

    forward = make_cnn_forward(params, NUM_FEATURES)     # constants built once
    out = jax.block_until_ready(forward(x))
    ref = jax.block_until_ready(reference_forward(x, params))

    assert out.shape == (B,), out.shape
    err = float(jnp.max(jnp.abs(out - ref)))
    if err > 5e-3:
        raise AssertionError(f"Pallas kernel mismatch vs f32 reference: max abs err {err}")
    print("KERNEL_OK")
</pallas_src>

<mosaic_0001>
module attributes {stable_mosaic.version = 11 : i64} {
  func.func @_cnn_kernel(%arg0: i32, %arg1: memref<128x16xbf16, #tpu.memory_space<vmem>>, %arg2: memref<16x256xbf16, #tpu.memory_space<vmem>>, %arg3: memref<1x256xf32, #tpu.memory_space<vmem>>, %arg4: memref<128x256xbf16, #tpu.memory_space<vmem>>, %arg5: memref<1x256xf32, #tpu.memory_space<vmem>>, %arg6: memref<128x64xbf16, #tpu.memory_space<vmem>>, %arg7: memref<1x64xf32, #tpu.memory_space<vmem>>, %arg8: memref<1x64xf32, #tpu.memory_space<vmem>>, %arg9: memref<1x1xf32, #tpu.memory_space<vmem>>, %arg10: memref<1x1x128xf32, #tpu.memory_space<vmem>>) attributes {dimension_semantics = [#tpu.dimension_semantics<parallel>], iteration_bounds = array<i64: 1>, scalar_prefetch = 0 : i64, scratch_operands = 0 : i64, tpu.core_type = #tpu.core_type<tc>, window_params = [{transform_indices = @transform_0, window_bounds = array<i64: 128, 16>}, {pipeline_mode = #tpu.pipeline_mode<synchronous>, transform_indices = @transform_1, window_bounds = array<i64: 16, 256>}, {pipeline_mode = #tpu.pipeline_mode<synchronous>, transform_indices = @transform_2, window_bounds = array<i64: 1, 256>}, {pipeline_mode = #tpu.pipeline_mode<synchronous>, transform_indices = @transform_3, window_bounds = array<i64: 128, 256>}, {pipeline_mode = #tpu.pipeline_mode<synchronous>, transform_indices = @transform_4, window_bounds = array<i64: 1, 256>}, {pipeline_mode = #tpu.pipeline_mode<synchronous>, transform_indices = @transform_5, window_bounds = array<i64: 128, 64>}, {pipeline_mode = #tpu.pipeline_mode<synchronous>, transform_indices = @transform_6, window_bounds = array<i64: 1, 64>}, {pipeline_mode = #tpu.pipeline_mode<synchronous>, transform_indices = @transform_7, window_bounds = array<i64: 1, 64>}, {pipeline_mode = #tpu.pipeline_mode<synchronous>, transform_indices = @transform_8, window_bounds = array<i64: 1, 1>}, {transform_indices = @transform_9, window_bounds = array<i64: 1, 1, 128>}]} {
    %c0 = arith.constant 0 : index
    %c0_0 = arith.constant 0 : index
    %0 = vector.load %arg1[%c0, %c0_0] : memref<128x16xbf16, #tpu.memory_space<vmem>>, vector<128x16xbf16>
    %c0_1 = arith.constant 0 : index
    %c0_2 = arith.constant 0 : index
    %1 = vector.load %arg2[%c0_1, %c0_2] : memref<16x256xbf16, #tpu.memory_space<vmem>>, vector<16x256xbf16>
    %cst = arith.constant dense<0.000000e+00> : vector<128x256xf32>
    %2 = tpu.matmul %0, %1, %cst {dimension_numbers = #tpu.dot_dimension_numbers<[1], [0], [0], [1], [0, 0, 1, 1], [], []>} : vector<128x16xbf16>, vector<16x256xbf16>, vector<128x256xf32> -> vector<128x256xf32>
    %c0_3 = arith.constant 0 : index
    %c0_4 = arith.constant 0 : index
    %3 = vector.load %arg3[%c0_3, %c0_4] : memref<1x256xf32, #tpu.memory_space<vmem>>, vector<1x256xf32>
    %4 = vector.broadcast %3 : vector<1x256xf32> to vector<128x256xf32>
    %5 = arith.addf %2, %4 : vector<128x256xf32>
    %cst_5 = arith.constant 0.000000e+00 : f32
    %6 = vector.broadcast %cst_5 : f32 to vector<128x256xf32>
    %7 = arith.maximumf %5, %6 : vector<128x256xf32>
    %8 = vector.extract_strided_slice %7 {offsets = [0, 0], sizes = [128, 128], strides = [1, 1]} : vector<128x256xf32> to vector<128x128xf32>
    %9 = vector.extract_strided_slice %7 {offsets = [0, 128], sizes = [128, 128], strides = [1, 1]} : vector<128x256xf32> to vector<128x128xf32>
    %10 = arith.maximumf %8, %9 : vector<128x128xf32>
    %11 = arith.truncf %10 : vector<128x128xf32> to vector<128x128xbf16>
    %c0_6 = arith.constant 0 : index
    %c0_7 = arith.constant 0 : index
    %12 = vector.load %arg4[%c0_6, %c0_7] : memref<128x256xbf16, #tpu.memory_space<vmem>>, vector<128x256xbf16>
    %cst_8 = arith.constant dense<0.000000e+00> : vector<128x256xf32>
    %13 = tpu.matmul %11, %12, %cst_8 {dimension_numbers = #tpu.dot_dimension_numbers<[1], [0], [0], [1], [0, 0, 1, 1], [], []>} : vector<128x128xbf16>, vector<128x256xbf16>, vector<128x256xf32> -> vector<128x256xf32>
    %c0_9 = arith.constant 0 : index
    %c0_10 = arith.constant 0 : index
    %14 = vector.load %arg5[%c0_9, %c0_10] : memref<1x256xf32, #tpu.memory_space<vmem>>, vector<1x256xf32>
    %15 = vector.broadcast %14 : vector<1x256xf32> to vector<128x256xf32>
    %16 = arith.addf %13, %15 : vector<128x256xf32>
    %cst_11 = arith.constant 0.000000e+00 : f32
    %17 = vector.broadcast %cst_11 : f32 to vector<128x256xf32>
    %18 = arith.maximumf %16, %17 : vector<128x256xf32>
    %19 = vector.extract_strided_slice %18 {offsets = [0, 0], sizes = [128, 128], strides = [1, 1]} : vector<128x256xf32> to vector<128x128xf32>
    %20 = vector.extract_strided_slice %18 {offsets = [0, 128], sizes = [128, 128], strides = [1, 1]} : vector<128x256xf32> to vector<128x128xf32>
    %21 = arith.maximumf %19, %20 : vector<128x128xf32>
    %22 = arith.truncf %21 : vector<128x128xf32> to vector<128x128xbf16>
    %c0_12 = arith.constant 0 : index
    %c0_13 = arith.constant 0 : index
    %23 = vector.load %arg6[%c0_12, %c0_13] : memref<128x64xbf16, #tpu.memory_space<vmem>>, vector<128x64xbf16>
    %cst_14 = arith.constant dense<0.000000e+00> : vector<128x64xf32>
    %24 = tpu.matmul %22, %23, %cst_14 {dimension_numbers = #tpu.dot_dimension_numbers<[1], [0], [0], [1], [0, 0, 1, 1], [], []>} : vector<128x128xbf16>, vector<128x64xbf16>, vector<128x64xf32> -> vector<128x64xf32>
    %c0_15 = arith.constant 0 : index
    %c0_16 = arith.constant 0 : index
    %25 = vector.load %arg7[%c0_15, %c0_16] : memref<1x64xf32, #tpu.memory_space<vmem>>, vector<1x64xf32>
    %26 = vector.broadcast %25 : vector<1x64xf32> to vector<128x64xf32>
    %27 = arith.addf %24, %26 : vector<128x64xf32>
    %cst_17 = arith.constant 0.000000e+00 : f32
    %28 = vector.broadcast %cst_17 : f32 to vector<128x64xf32>
    %29 = arith.maximumf %27, %28 : vector<128x64xf32>
    %c0_18 = arith.constant 0 : index
    %c0_19 = arith.constant 0 : index
    %30 = vector.load %arg8[%c0_18, %c0_19] : memref<1x64xf32, #tpu.memory_space<vmem>>, vector<1x64xf32>
    %cst_20 = arith.constant dense<0.000000e+00> : vector<1x128xf32>
    %31 = tpu.matmul %30, %29, %cst_20 {dimension_numbers = #tpu.dot_dimension_numbers<[1], [1], [0], [0], [0, 0, 1, 0], [], []>} : vector<1x64xf32>, vector<128x64xf32>, vector<1x128xf32> -> vector<1x128xf32>
    %c0_21 = arith.constant 0 : index
    %c0_22 = arith.constant 0 : index
    %32 = vector.load %arg9[%c0_21, %c0_22] : memref<1x1xf32, #tpu.memory_space<vmem>>, vector<1x1xf32>
    %33 = vector.broadcast %32 : vector<1x1xf32> to vector<1x128xf32>
    %34 = arith.addf %31, %33 : vector<1x128xf32>
    %cst_23 = arith.constant 0.000000e+00 : f32
    %35 = vector.broadcast %cst_23 : f32 to vector<1x128xf32>
    %36 = arith.subf %35, %34 : vector<1x128xf32>
    %37 = math.exp %36 : vector<1x128xf32>
    %cst_24 = arith.constant 1.000000e+00 : f32
    %38 = vector.broadcast %cst_24 : f32 to vector<1x128xf32>
    %39 = arith.addf %38, %37 : vector<1x128xf32>
    %cst_25 = arith.constant 1.000000e+00 : f32
    %40 = vector.broadcast %cst_25 : f32 to vector<1x128xf32>
    %41 = arith.divf %40, %39 : vector<1x128xf32>
    %42 = vector.shape_cast %41 : vector<1x128xf32> to vector<1x1x128xf32>
    %c0_26 = arith.constant 0 : index
    %c0_27 = arith.constant 0 : index
    %c0_28 = arith.constant 0 : index
    %43 = vector.load %arg10[%c0_26, %c0_27, %c0_28] : memref<1x1x128xf32, #tpu.memory_space<vmem>>, vector<1x1x128xf32>
    tpu.vector_store %arg10[%c0_26, %c0_27, %c0_28], %42 {strides = array<i32>} : memref<1x1x128xf32, #tpu.memory_space<vmem>>, vector<1x1x128xf32>,
    return
  }
  func.func @transform_0(%arg0: i32) -> (i32, i32) {
    %c0_i32 = arith.constant 0 : i32
    %c0_i32_0 = arith.constant 0 : i32
    return %arg0, %c0_i32 : i32, i32
  }
  func.func @transform_1(%arg0: i32) -> (i32, i32) {
    %c0_i32 = arith.constant 0 : i32
    %c0_i32_0 = arith.constant 0 : i32
    %c0_i32_1 = arith.constant 0 : i32
    return %c0_i32, %c0_i32_0 : i32, i32
  }
  func.func @transform_2(%arg0: i32) -> (i32, i32) {
    %c0_i32 = arith.constant 0 : i32
    %c0_i32_0 = arith.constant 0 : i32
    %c0_i32_1 = arith.constant 0 : i32
    return %c0_i32, %c0_i32_0 : i32, i32
  }
  func.func @transform_3(%arg0: i32) -> (i32, i32) {
    %c0_i32 = arith.constant 0 : i32
    %c0_i32_0 = arith.constant 0 : i32
    %c0_i32_1 = arith.constant 0 : i32
    return %c0_i32, %c0_i32_0 : i32, i32
  }
  func.func @transform_4(%arg0: i32) -> (i32, i32) {
    %c0_i32 = arith.constant 0 : i32
    %c0_i32_0 = arith.constant 0 : i32
    %c0_i32_1 = arith.constant 0 : i32
    return %c0_i32, %c0_i32_0 : i32, i32
  }
  func.func @transform_5(%arg0: i32) -> (i32, i32) {
    %c0_i32 = arith.constant 0 : i32
    %c0_i32_0 = arith.constant 0 : i32
    %c0_i32_1 = arith.constant 0 : i32
    return %c0_i32, %c0_i32_0 : i32, i32
  }
  func.func @transform_6(%arg0: i32) -> (i32, i32) {
    %c0_i32 = arith.constant 0 : i32
    %c0_i32_0 = arith.constant 0 : i32
    %c0_i32_1 = arith.constant 0 : i32
    return %c0_i32, %c0_i32_0 : i32, i32
  }
  func.func @transform_7(%arg0: i32) -> (i32, i32) {
    %c0_i32 = arith.constant 0 : i32
    %c0_i32_0 = arith.constant 0 : i32
    %c0_i32_1 = arith.constant 0 : i32
    return %c0_i32, %c0_i32_0 : i32, i32
  }
  func.func @transform_8(%arg0: i32) -> (i32, i32) {
    %c0_i32 = arith.constant 0 : i32
    %c0_i32_0 = arith.constant 0 : i32
    %c0_i32_1 = arith.constant 0 : i32
    return %c0_i32, %c0_i32_0 : i32, i32
  }
  func.func @transform_9(%arg0: i32) -> (i32, i32, i32) {
    %c0_i32 = arith.constant 0 : i32
    %c0_i32_0 = arith.constant 0 : i32
    %c0_i32_1 = arith.constant 0 : i32
    return %arg0, %c0_i32, %c0_i32_0 : i32, i32, i32
  }
}

</mosaic_0001>

<llo_original>
// kernel: forward.1
$region0: #{forward.1}
  #allocation0 [shape = 'u32[]', space=smem, size = 0x4, offset = 0x4, fixed_abs, tag = 'smem constant byte address 0x4 - core index']
  #allocation1 [shape = 'u32[144,128]{1,0:T(1,128)}', space=vmem, size = 0x12000, scoped, tag = 'internal scratch']
  #allocation2 [shape = 'f32[1,1]{1,0:T(1,128)S(1)}', space=vmem, size = 0x200, scoped, tag = 'scoped memory for forward.1']
  %s0 = inlined_call_operand.vmem [shape: bf16[128,16], index: 0, kind: input, shape index: {}]
  %s1 = inlined_call_operand.vmem [shape: bf16[16,256], index: 1, kind: input, shape index: {}]
  %s2 = inlined_call_operand.vmem [shape: f32[1,256], index: 2, kind: input, shape index: {}]
  %s3 = inlined_call_operand.vmem [shape: bf16[128,256], index: 3, kind: input, shape index: {}]
  %s4 = inlined_call_operand.vmem [shape: f32[1,256], index: 4, kind: input, shape index: {}]
  %s5 = inlined_call_operand.vmem [shape: bf16[128,64], index: 5, kind: input, shape index: {}]
  %s6 = inlined_call_operand.vmem [shape: f32[1,64], index: 6, kind: input, shape index: {}]
  %s7 = inlined_call_operand.vmem [shape: f32[1,64], index: 7, kind: input, shape index: {}]
  %s8 = inlined_call_operand.<no memory space> [shape: f32[1,1], index: 8, kind: input, shape index: {}]
  %s9 = inlined_call_operand.vmem [shape: f32[1,1,128], index: 9, kind: output, shape index: {}]
  %s10 = sld [smem:[#allocation0]]
  $region46: #{forward.1} parent=0
    _
  %s12 = ssub.s32 1, %s10
  %s13 = scalar_select 0, %s12, %s10
  %v14 = vstv %s8
  %15 = vst [vmem:[#allocation2] sm:$0x1] %v14
  // Predicated region
  $region2: #{forward.1} parent=0 // pred_check
    _
  $region3: #{forward.1} parent=0 // pred_check_branch
    %17 = sbr.rel (0) target = $region5
  $region4: #{forward.1} parent=0 // pred_region
    _
  $region5: #{forward.1} parent=0 // pred_fallthru
    _
  // Predicated region
  $region6: #{forward.1} parent=0 // pred_check
    _
  $region7: #{forward.1} parent=0 // pred_check_branch
    %19 = sbr.rel (0) target = $region9
  $region8: #{forward.1} parent=0 // pred_region
    _
  $region9: #{forward.1} parent=0 // pred_fallthru
    _
  // Predicated region
  $region10: #{forward.1} parent=0 // pred_check
    _
  $region11: #{forward.1} parent=0 // pred_check_branch
    %21 = sbr.rel (0) target = $region13
  $region12: #{forward.1} parent=0 // pred_region
    _
  $region13: #{forward.1} parent=0 // pred_fallthru
    _
  // Predicated region
  $region14: #{forward.1} parent=0 // pred_check
    _
  $region15: #{forward.1} parent=0 // pred_check_branch
    %23 = sbr.rel (0) target = $region17
  $region16: #{forward.1} parent=0 // pred_region
    _
  $region17: #{forward.1} parent=0 // pred_fallthru
    _
  // Predicated region
  $region18: #{forward.1} parent=0 // pred_check
    _
  $region19: #{forward.1} parent=0 // pred_check_branch
    %25 = sbr.rel (0) target = $region21
  $region20: #{forward.1} parent=0 // pred_region
    _
  $region21: #{forward.1} parent=0 // pred_fallthru
    _
  // Predicated region
  $region22: #{forward.1} parent=0 // pred_check
    _
  $region23: #{forward.1} parent=0 // pred_check_branch
    %27 = sbr.rel (0) target = $region25
  $region24: #{forward.1} parent=0 // pred_region
    _
  $region25: #{forward.1} parent=0 // pred_fallthru
    _
  // Predicated region
  $region26: #{forward.1} parent=0 // pred_check
    _
  $region27: #{forward.1} parent=0 // pred_check_branch
    %29 = sbr.rel (0) target = $region29
  $region28: #{forward.1} parent=0 // pred_region
    _
  $region29: #{forward.1} parent=0 // pred_fallthru
    _
  // Predicated region
  $region30: #{forward.1} parent=0 // pred_check
    _
  $region31: #{forward.1} parent=0 // pred_check_branch
    %31 = sbr.rel (0) target = $region33
  $region32: #{forward.1} parent=0 // pred_region
    _
  $region33: #{forward.1} parent=0 // pred_fallthru
    _
  // Predicated region
  $region34: #{forward.1} parent=0 // pred_check
    _
  $region35: #{forward.1} parent=0 // pred_check_branch
    %33 = sbr.rel (0) target = $region37
  $region36: #{forward.1} parent=0 // pred_region
    _
  $region37: #{forward.1} parent=0 // pred_fallthru
    _
  %v35 = vld [vmem:[%s0] sm:$0xf]
  %v36 = vld [vmem:[%s0 + $0x4] sm:$0xf]
  %v37 = vld [vmem:[%s0 + $0x8] sm:$0xf]
  %v38 = vld [vmem:[%s0 + $0xc] sm:$0xf]
  %v39 = vld [vmem:[%s0 + $0x10] sm:$0xf]
  %v40 = vld [vmem:[%s0 + $0x14] sm:$0xf]
  %v41 = vld [vmem:[%s0 + $0x18] sm:$0xf]
  %v42 = vld [vmem:[%s0 + $0x1c] sm:$0xf]
  %v43 = vld [vmem:[%s0 + $0x20] sm:$0xf]
  %v44 = vld [vmem:[%s0 + $0x24] sm:$0xf]
  %v45 = vld [vmem:[%s0 + $0x28] sm:$0xf]
  %v46 = vld [vmem:[%s0 + $0x2c] sm:$0xf]
  %v47 = vld [vmem:[%s0 + $0x30] sm:$0xf]
  %v48 = vld [vmem:[%s0 + $0x34] sm:$0xf]
  %v49 = vld [vmem:[%s0 + $0x38] sm:$0xf]
  %v50 = vld [vmem:[%s0 + $0x3c] sm:$0xf]
  %v51 = vld [vmem:[%s1] sm:$0xff]
  %v52 = vld [vmem:[%s1 + $0x8] sm:$0xff]
  %v53 = vld [vmem:[%s2] sm:$0x3]
  %v55 = vlaneseq
  %v56 = vshrl.u32 %v55, 7
  %v57 = vsub.s32 0, %v56
  %v58 = vrot.slane %v53, %v57
  %v59 = vlaneseq
  %v60 = vshrl.u32 %v59, 7
  %v61 = vsub.s32 1, %v60
  %v62 = vrot.slane %v53, %v61
  %v81 = vunpack.c.l.b16 %v35
  %v82 = vunpack.c.l.b16 %v36
  %v83 = vunpack.c.l.b16 %v37
  %v84 = vunpack.c.l.b16 %v38
  %v85 = vunpack.c.l.b16 %v39
  %v86 = vunpack.c.l.b16 %v40
  %v87 = vunpack.c.l.b16 %v41
  %v88 = vunpack.c.l.b16 %v42
  %v89 = vunpack.c.l.b16 %v43
  %v90 = vunpack.c.l.b16 %v44
  %v91 = vunpack.c.l.b16 %v45
  %v92 = vunpack.c.l.b16 %v46
  %v93 = vunpack.c.l.b16 %v47
  %v94 = vunpack.c.l.b16 %v48
  %v95 = vunpack.c.l.b16 %v49
  %v96 = vunpack.c.l.b16 %v50
  %v97 = vpack.c.b16 %v82, %v81
  %v98 = vpack.c.b16 %v84, %v83
  %v99 = vpack.c.b16 %v86, %v85
  %v100 = vpack.c.b16 %v88, %v87
  %v101 = vpack.c.b16 %v90, %v89
  %v102 = vpack.c.b16 %v92, %v91
  %v103 = vpack.c.b16 %v94, %v93
  %v104 = vpack.c.b16 %v96, %v95
  %v107 = vunpack.c.l.b16 %v51
  %v108 = vunpack.c.h.b16 %v51
  %v109 = vunpack.c.l.b16 %v52
  %v110 = vunpack.c.h.b16 %v52
  %v111 = vpack.c.b16 %v109, %v107
  %v112 = vpack.c.b16 %v110, %v108
  %vm115 = vcmask 130048
  %v117 = vsel %vm115, %v97, 0
  %v120 = vsel %vm115, %v98, 0
  %v123 = vsel %vm115, %v99, 0
  %v126 = vsel %vm115, %v100, 0
  %v129 = vsel %vm115, %v101, 0
  %v132 = vsel %vm115, %v102, 0
  %v135 = vsel %vm115, %v103, 0
  %v138 = vsel %vm115, %v104, 0
  %140 = vmatprep.subr.bf16.mxu0 %v112
  %141 = vmatpush1.bf16.msra.mxu0 %v111
  %142 = vmatprep.subr.bf16.mxu0 0
  %143 = vmatpush1.bf16.msra.mxu0 0
  %144 = vmatprep.subr.bf16.mxu0 0
  %145 = vmatpush1.bf16.msra.mxu0 0
  %146 = vmatprep.subr.bf16.mxu0 0
  %147 = vmatpush1.bf16.msra.mxu0 0
  %148 = vmatprep.subr.bf16.mxu0 0
  %149 = vmatpush1.bf16.msra.mxu0 0
  %150 = vmatprep.subr.bf16.mxu0 0
  %151 = vmatpush1.bf16.msra.mxu0 0
  %152 = vmatprep.subr.bf16.mxu0 0
  %153 = vmatpush1.bf16.msra.mxu0 0
  %154 = vmatprep.subr.bf16.mxu0 0
  %155 = vmatpush1.bf16.msra.mxu0 0
  %156 = vmatprep.subr.bf16.mxu0 0
  %157 = vmatpush1.bf16.msra.mxu0 0
  %158 = vmatprep.subr.bf16.mxu0 0
  %159 = vmatpush1.bf16.msra.mxu0 0
  %160 = vmatprep.subr.bf16.mxu0 0
  %161 = vmatpush1.bf16.msra.mxu0 0
  %162 = vmatprep.subr.bf16.mxu0 0
  %163 = vmatpush1.bf16.msra.mxu0 0
  %164 = vmatprep.subr.bf16.mxu0 0
  %165 = vmatpush1.bf16.msra.mxu0 0
  %166 = vmatprep.subr.bf16.mxu0 0
  %167 = vmatpush1.bf16.msra.mxu0 0
  %168 = vmatprep.subr.bf16.mxu0 0
  %169 = vmatpush1.bf16.msra.mxu0 0
  %170 = vmatprep.subr.bf16.mxu0 0
  %171 = vmatpush1.bf16.msra.mxu0 0
  %172 = vmatprep.mubr.bf16.mxu0 0
  %173 = vmatmul.mubr.bf16.gmra.mrb[0].mxu0 %v117
  %v174 = vpop.f32.mrb[0].mxu0
  %v175 = vadd.f32 %v58, %v174
  %v176 = vpop.f32.mrb[0].mxu0
  %v177 = vadd.f32 %v62, %v176
  %v178 = vpop.f32.mrb[0].mxu0
  %v179 = vadd.f32 %v58, %v178
  %v180 = vpop.f32.mrb[0].mxu0
  %v181 = vadd.f32 %v62, %v180
  %182 = vmatprep.mubr.bf16.mxu0 0
  %183 = vmatmul.mubr.bf16.gmra.mrb[0].mxu0 %v120
  %v184 = vpop.f32.mrb[0].mxu0
  %v185 = vadd.f32 %v58, %v184
  %v186 = vpop.f32.mrb[0].mxu0
  %v187 = vadd.f32 %v62, %v186
  %v188 = vpop.f32.mrb[0].mxu0
  %v189 = vadd.f32 %v58, %v188
  %v190 = vpop.f32.mrb[0].mxu0
  %v191 = vadd.f32 %v62, %v190
  %192 = vmatprep.mubr.bf16.mxu0 0
  %193 = vmatmul.mubr.bf16.gmra.mrb[0].mxu0 %v123
  %v194 = vpop.f32.mrb[0].mxu0
  %v195 = vadd.f32 %v58, %v194
  %v196 = vpop.f32.mrb[0].mxu0
  %v197 = vadd.f32 %v62, %v196
  %v198 = vpop.f32.mrb[0].mxu0
  %v199 = vadd.f32 %v58, %v198
  %v200 = vpop.f32.mrb[0].mxu0
  %v201 = vadd.f32 %v62, %v200
  %202 = vmatprep.mubr.bf16.mxu0 0
  %203 = vmatmul.mubr.bf16.gmra.mrb[0].mxu0 %v126
  %v204 = vpop.f32.mrb[0].mxu0
  %v205 = vadd.f32 %v58, %v204
  %v206 = vpop.f32.mrb[0].mxu0
  %v207 = vadd.f32 %v62, %v206
  %v208 = vpop.f32.mrb[0].mxu0
  %v209 = vadd.f32 %v58, %v208
  %v210 = vpop.f32.mrb[0].mxu0
  %v211 = vadd.f32 %v62, %v210
  %212 = vmatprep.mubr.bf16.mxu0 0
  %213 = vmatmul.mubr.bf16.gmra.mrb[0].mxu0 %v129
  %v214 = vpop.f32.mrb[0].mxu0
  %v215 = vadd.f32 %v58, %v214
  %v216 = vpop.f32.mrb[0].mxu0
  %v217 = vadd.f32 %v62, %v216
  %v218 = vpop.f32.mrb[0].mxu0
  %v219 = vadd.f32 %v58, %v218
  %v220 = vpop.f32.mrb[0].mxu0
  %v221 = vadd.f32 %v62, %v220
  %222 = vmatprep.mubr.bf16.mxu0 0
  %223 = vmatmul.mubr.bf16.gmra.mrb[0].mxu0 %v132
  %v224 = vpop.f32.mrb[0].mxu0
  %v225 = vadd.f32 %v58, %v224
  %v226 = vpop.f32.mrb[0].mxu0
  %v227 = vadd.f32 %v62, %v226
  %v228 = vpop.f32.mrb[0].mxu0
  %v229 = vadd.f32 %v58, %v228
  %v230 = vpop.f32.mrb[0].mxu0
  %v231 = vadd.f32 %v62, %v230
  %232 = vmatprep.mubr.bf16.mxu0 0
  %233 = vmatmul.mubr.bf16.gmra.mrb[0].mxu0 %v135
  %v234 = vpop.f32.mrb[0].mxu0
  %v235 = vadd.f32 %v58, %v234
  %v236 = vpop.f32.mrb[0].mxu0
  %v237 = vadd.f32 %v62, %v236
  %v238 = vpop.f32.mrb[0].mxu0
  %v239 = vadd.f32 %v58, %v238
  %v240 = vpop.f32.mrb[0].mxu0
  %v241 = vadd.f32 %v62, %v240
  %242 = vmatprep.mubr.bf16.mxu0 0
  %243 = vmatmul.mubr.bf16.gmra.mrb[0].mxu0 %v138
  %v244 = vpop.f32.mrb[0].mxu0
  %v245 = vadd.f32 %v58, %v244
  %v246 = vpop.f32.mrb[0].mxu0
  %v247 = vadd.f32 %v62, %v246
  %v248 = vpop.f32.mrb[0].mxu0
  %v249 = vadd.f32 %v58, %v248
  %v250 = vpop.f32.mrb[0].mxu0
  %v251 = vadd.f32 %v62, %v250
  %252 = vdwg.mxu0
  %v253 = vmax.f32 %v175, 0.0
  %v254 = vmax.f32 %v177, 0.0
  %v255 = vmax.f32 %v179, 0.0
  %v256 = vmax.f32 %v181, 0.0
  %v257 = vmax.f32 %v185, 0.0
  %v258 = vmax.f32 %v187, 0.0
  %v259 = vmax.f32 %v189, 0.0
  %v260 = vmax.f32 %v191, 0.0
  %v261 = vmax.f32 %v195, 0.0
  %v262 = vmax.f32 %v197, 0.0
  %v263 = vmax.f32 %v199, 0.0
  %v264 = vmax.f32 %v201, 0.0
  %v265 = vmax.f32 %v205, 0.0
  %v266 = vmax.f32 %v207, 0.0
  %v267 = vmax.f32 %v209, 0.0
  %v268 = vmax.f32 %v211, 0.0
  %v269 = vmax.f32 %v215, 0.0
  %v270 = vmax.f32 %v217, 0.0
  %v271 = vmax.f32 %v219, 0.0
  %v272 = vmax.f32 %v221, 0.0
  %v273 = vmax.f32 %v225, 0.0
  %v274 = vmax.f32 %v227, 0.0
  %v275 = vmax.f32 %v229, 0.0
  %v276 = vmax.f32 %v231, 0.0
  %v277 = vmax.f32 %v235, 0.0
  %v278 = vmax.f32 %v237, 0.0
  %v279 = vmax.f32 %v239, 0.0
  %v280 = vmax.f32 %v241, 0.0
  %v281 = vmax.f32 %v245, 0.0
  %v282 = vmax.f32 %v247, 0.0
  %v283 = vmax.f32 %v249, 0.0
  %v284 = vmax.f32 %v251, 0.0
  %v285 = vmax.f32 %v253, %v254
  %v286 = vmax.f32 %v255, %v256
  %v287 = vmax.f32 %v257, %v258
  %v288 = vmax.f32 %v259, %v260
  %v289 = vmax.f32 %v261, %v262
  %v290 = vmax.f32 %v263, %v264
  %v291 = vmax.f32 %v265, %v266
  %v292 = vmax.f32 %v267, %v268
  %v293 = vmax.f32 %v269, %v270
  %v294 = vmax.f32 %v271, %v272
  %v295 = vmax.f32 %v273, %v274
  %v296 = vmax.f32 %v275, %v276
  %v297 = vmax.f32 %v277, %v278
  %v298 = vmax.f32 %v279, %v280
  %v299 = vmax.f32 %v281, %v282
  %v300 = vmax.f32 %v283, %v284
  %v301 = vpack.c.bf16 %v286, %v285
  %v302 = vpack.c.bf16 %v288, %v287
  %v303 = vpack.c.bf16 %v290, %v289
  %v304 = vpack.c.bf16 %v292, %v291
  %v305 = vpack.c.bf16 %v294, %v293
  %v306 = vpack.c.bf16 %v296, %v295
  %v307 = vpack.c.bf16 %v298, %v297
  %v308 = vpack.c.bf16 %v300, %v299
  %v309 = vld [vmem:[%s3] sm:$0xff]
  %v310 = vld [vmem:[%s3 + $0x8] sm:$0xff]
  %v311 = vld [vmem:[%s3 + $0x10] sm:$0xff]
  %v312 = vld [vmem:[%s3 + $0x18] sm:$0xff]
  %v313 = vld [vmem:[%s3 + $0x20] sm:$0xff]
  %v314 = vld [vmem:[%s3 + $0x28] sm:$0xff]
  %v315 = vld [vmem:[%s3 + $0x30] sm:$0xff]
  %v316 = vld [vmem:[%s3 + $0x38] sm:$0xff]
  %v317 = vld [vmem:[%s3 + $0x40] sm:$0xff]
  %v318 = vld [vmem:[%s3 + $0x48] sm:$0xff]
  %v319 = vld [vmem:[%s3 + $0x50] sm:$0xff]
  %v320 = vld [vmem:[%s3 + $0x58] sm:$0xff]
  %v321 = vld [vmem:[%s3 + $0x60] sm:$0xff]
  %v322 = vld [vmem:[%s3 + $0x68] sm:$0xff]
  %v323 = vld [vmem:[%s3 + $0x70] sm:$0xff]
  %v324 = vld [vmem:[%s3 + $0x78] sm:$0xff]
  %v325 = vld [vmem:[%s4] sm:$0x3]
  %v327 = vlaneseq
  %v328 = vshrl.u32 %v327, 7
  %v329 = vsub.s32 0, %v328
  %v330 = vrot.slane %v325, %v329
  %v331 = vlaneseq
  %v332 = vshrl.u32 %v331, 7
  %v333 = vsub.s32 1, %v332
  %v334 = vrot.slane %v325, %v333
  %v353 = vunpack.c.l.b16 %v309
  %v354 = vunpack.c.h.b16 %v309
  %v355 = vunpack.c.l.b16 %v310
  %v356 = vunpack.c.h.b16 %v310
  %v357 = vunpack.c.l.b16 %v311
  %v358 = vunpack.c.h.b16 %v311
  %v359 = vunpack.c.l.b16 %v312
  %v360 = vunpack.c.h.b16 %v312
  %v361 = vunpack.c.l.b16 %v313
  %v362 = vunpack.c.h.b16 %v313
  %v363 = vunpack.c.l.b16 %v314
  %v364 = vunpack.c.h.b16 %v314
  %v365 = vunpack.c.l.b16 %v315
  %v366 = vunpack.c.h.b16 %v315
  %v367 = vunpack.c.l.b16 %v316
  %v368 = vunpack.c.h.b16 %v316
  %v369 = vunpack.c.l.b16 %v317
  %v370 = vunpack.c.h.b16 %v317
  %v371 = vunpack.c.l.b16 %v318
  %v372 = vunpack.c.h.b16 %v318
  %v373 = vunpack.c.l.b16 %v319
  %v374 = vunpack.c.h.b16 %v319
  %v375 = vunpack.c.l.b16 %v320
  %v376 = vunpack.c.h.b16 %v320
  %v377 = vunpack.c.l.b16 %v321
  %v378 = vunpack.c.h.b16 %v321
  %v379 = vunpack.c.l.b16 %v322
  %v380 = vunpack.c.h.b16 %v322
  %v381 = vunpack.c.l.b16 %v323
  %v382 = vunpack.c.h.b16 %v323
  %v383 = vunpack.c.l.b16 %v324
  %v384 = vunpack.c.h.b16 %v324
  %v385 = vpack.c.b16 %v355, %v353
  %v386 = vpack.c.b16 %v356, %v354
  %v387 = vpack.c.b16 %v359, %v357
  %v388 = vpack.c.b16 %v360, %v358
  %v389 = vpack.c.b16 %v363, %v361
  %v390 = vpack.c.b16 %v364, %v362
  %v391 = vpack.c.b16 %v367, %v365
  %v392 = vpack.c.b16 %v368, %v366
  %v393 = vpack.c.b16 %v371, %v369
  %v394 = vpack.c.b16 %v372, %v370
  %v395 = vpack.c.b16 %v375, %v373
  %v396 = vpack.c.b16 %v376, %v374
  %v397 = vpack.c.b16 %v379, %v377
  %v398 = vpack.c.b16 %v380, %v378
  %v399 = vpack.c.b16 %v383, %v381
  %v400 = vpack.c.b16 %v384, %v382
  %417 = vmatprep.subr.bf16.mxu0 %v386
  %418 = vmatpush1.bf16.msra.mxu0 %v385
  %419 = vmatprep.subr.bf16.mxu0 %v388
  %420 = vmatpush1.bf16.msra.mxu0 %v387
  %421 = vmatprep.subr.bf16.mxu0 %v390
  %422 = vmatpush1.bf16.msra.mxu0 %v389
  %423 = vmatprep.subr.bf16.mxu0 %v392
  %424 = vmatpush1.bf16.msra.mxu0 %v391
  %425 = vmatprep.subr.bf16.mxu0 %v394
  %426 = vmatpush1.bf16.msra.mxu0 %v393
  %427 = vmatprep.subr.bf16.mxu0 %v396
  %428 = vmatpush1.bf16.msra.mxu0 %v395
  %429 = vmatprep.subr.bf16.mxu0 %v398
  %430 = vmatpush1.bf16.msra.mxu0 %v397
  %431 = vmatprep.subr.bf16.mxu0 %v400
  %432 = vmatpush1.bf16.msra.mxu0 %v399
  %433 = vmatprep.subr.bf16.mxu0 0
  %434 = vmatpush1.bf16.msra.mxu0 0
  %435 = vmatprep.subr.bf16.mxu0 0
  %436 = vmatpush1.bf16.msra.mxu0 0
  %437 = vmatprep.subr.bf16.mxu0 0
  %438 = vmatpush1.bf16.msra.mxu0 0
  %439 = vmatprep.subr.bf16.mxu0 0
  %440 = vmatpush1.bf16.msra.mxu0 0
  %441 = vmatprep.subr.bf16.mxu0 0
  %442 = vmatpush1.bf16.msra.mxu0 0
  %443 = vmatprep.subr.bf16.mxu0 0
  %444 = vmatpush1.bf16.msra.mxu0 0
  %445 = vmatprep.subr.bf16.mxu0 0
  %446 = vmatpush1.bf16.msra.mxu0 0
  %447 = vmatprep.subr.bf16.mxu0 0
  %448 = vmatpush1.bf16.msra.mxu0 0
  %449 = vmatprep.mubr.bf16.mxu0 0
  %450 = vmatmul.mubr.bf16.gmra.mrb[0].mxu0 %v301
  %v451 = vpop.f32.mrb[0].mxu0
  %v452 = vadd.f32 %v330, %v451
  %v453 = vpop.f32.mrb[0].mxu0
  %v454 = vadd.f32 %v334, %v453
  %v455 = vpop.f32.mrb[0].mxu0
  %v456 = vadd.f32 %v330, %v455
  %v457 = vpop.f32.mrb[0].mxu0
  %v458 = vadd.f32 %v334, %v457
  %459 = vmatprep.mubr.bf16.mxu0 0
  %460 = vmatmul.mubr.bf16.gmra.mrb[0].mxu0 %v302
  %v461 = vpop.f32.mrb[0].mxu0
  %v462 = vadd.f32 %v330, %v461
  %v463 = vpop.f32.mrb[0].mxu0
  %v464 = vadd.f32 %v334, %v463
  %v465 = vpop.f32.mrb[0].mxu0
  %v466 = vadd.f32 %v330, %v465
  %v467 = vpop.f32.mrb[0].mxu0
  %v468 = vadd.f32 %v334, %v467
  %469 = vmatprep.mubr.bf16.mxu0 0
  %470 = vmatmul.mubr.bf16.gmra.mrb[0].mxu0 %v303
  %v471 = vpop.f32.mrb[0].mxu0
  %v472 = vadd.f32 %v330, %v471
  %v473 = vpop.f32.mrb[0].mxu0
  %v474 = vadd.f32 %v334, %v473
  %v475 = vpop.f32.mrb[0].mxu0
  %v476 = vadd.f32 %v330, %v475
  %v477 = vpop.f32.mrb[0].mxu0
  %v478 = vadd.f32 %v334, %v477
  %479 = vmatprep.mubr.bf16.mxu0 0
  %480 = vmatmul.mubr.bf16.gmra.mrb[0].mxu0 %v304
  %v481 = vpop.f32.mrb[0].mxu0
  %v482 = vadd.f32 %v330, %v481
  %v483 = vpop.f32.mrb[0].mxu0
  %v484 = vadd.f32 %v334, %v483
  %v485 = vpop.f32.mrb[0].mxu0
  %v486 = vadd.f32 %v330, %v485
  %v487 = vpop.f32.mrb[0].mxu0
  %v488 = vadd.f32 %v334, %v487
  %489 = vmatprep.mubr.bf16.mxu0 0
  %490 = vmatmul.mubr.bf16.gmra.mrb[0].mxu0 %v305
  %v491 = vpop.f32.mrb[0].mxu0
  %v492 = vadd.f32 %v330, %v491
  %v493 = vpop.f32.mrb[0].mxu0
  %v494 = vadd.f32 %v334, %v493
  %v495 = vpop.f32.mrb[0].mxu0
  %v496 = vadd.f32 %v330, %v495
  %v497 = vpop.f32.mrb[0].mxu0
  %v498 = vadd.f32 %v334, %v497
  %499 = vmatprep.mubr.bf16.mxu0 0
  %500 = vmatmul.mubr.bf16.gmra.mrb[0].mxu0 %v306
  %v501 = vpop.f32.mrb[0].mxu0
  %v502 = vadd.f32 %v330, %v501
  %v503 = vpop.f32.mrb[0].mxu0
  %v504 = vadd.f32 %v334, %v503
  %v505 = vpop.f32.mrb[0].mxu0
  %v506 = vadd.f32 %v330, %v505
  %v507 = vpop.f32.mrb[0].mxu0
  %v508 = vadd.f32 %v334, %v507
  %509 = vmatprep.mubr.bf16.mxu0 0
  %510 = vmatmul.mubr.bf16.gmra.mrb[0].mxu0 %v307
  %v511 = vpop.f32.mrb[0].mxu0
  %v512 = vadd.f32 %v330, %v511
  %v513 = vpop.f32.mrb[0].mxu0
  %v514 = vadd.f32 %v334, %v513
  %v515 = vpop.f32.mrb[0].mxu0
  %v516 = vadd.f32 %v330, %v515
  %v517 = vpop.f32.mrb[0].mxu0
  %v518 = vadd.f32 %v334, %v517
  %519 = vmatprep.mubr.bf16.mxu0 0
  %520 = vmatmul.mubr.bf16.gmra.mrb[0].mxu0 %v308
  %v521 = vpop.f32.mrb[0].mxu0
  %v522 = vadd.f32 %v330, %v521
  %v523 = vpop.f32.mrb[0].mxu0
  %v524 = vadd.f32 %v334, %v523
  %v525 = vpop.f32.mrb[0].mxu0
  %v526 = vadd.f32 %v330, %v525
  %v527 = vpop.f32.mrb[0].mxu0
  %v528 = vadd.f32 %v334, %v527
  %529 = vdwg.mxu0
  %v530 = vmax.f32 %v452, 0.0
  %v531 = vmax.f32 %v454, 0.0
  %v532 = vmax.f32 %v456, 0.0
  %v533 = vmax.f32 %v458, 0.0
  %v534 = vmax.f32 %v462, 0.0
  %v535 = vmax.f32 %v464, 0.0
  %v536 = vmax.f32 %v466, 0.0
  %v537 = vmax.f32 %v468, 0.0
  %v538 = vmax.f32 %v472, 0.0
  %v539 = vmax.f32 %v474, 0.0
  %v540 = vmax.f32 %v476, 0.0
  %v541 = vmax.f32 %v478, 0.0
  %v542 = vmax.f32 %v482, 0.0
  %v543 = vmax.f32 %v484, 0.0
  %v544 = vmax.f32 %v486, 0.0
  %v545 = vmax.f32 %v488, 0.0
  %v546 = vmax.f32 %v492, 0.0
  %v547 = vmax.f32 %v494, 0.0
  %v548 = vmax.f32 %v496, 0.0
  %v549 = vmax.f32 %v498, 0.0
  %v550 = vmax.f32 %v502, 0.0
  %v551 = vmax.f32 %v504, 0.0
  %v552 = vmax.f32 %v506, 0.0
  %v553 = vmax.f32 %v508, 0.0
  %v554 = vmax.f32 %v512, 0.0
  %v555 = vmax.f32 %v514, 0.0
  %v556 = vmax.f32 %v516, 0.0
  %v557 = vmax.f32 %v518, 0.0
  %v558 = vmax.f32 %v522, 0.0
  %v559 = vmax.f32 %v524, 0.0
  %v560 = vmax.f32 %v526, 0.0
  %v561 = vmax.f32 %v528, 0.0
  %v562 = vmax.f32 %v530, %v531
  %v563 = vmax.f32 %v532, %v533
  %v564 = vmax.f32 %v534, %v535
  %v565 = vmax.f32 %v536, %v537
  %v566 = vmax.f32 %v538, %v539
  %v567 = vmax.f32 %v540, %v541
  %v568 = vmax.f32 %v542, %v543
  %v569 = vmax.f32 %v544, %v545
  %v570 = vmax.f32 %v546, %v547
  %v571 = vmax.f32 %v548, %v549
  %v572 = vmax.f32 %v550, %v551
  %v573 = vmax.f32 %v552, %v553
  %v574 = vmax.f32 %v554, %v555
  %v575 = vmax.f32 %v556, %v557
  %v576 = vmax.f32 %v558, %v559
  %v577 = vmax.f32 %v560, %v561
  %v578 = vpack.c.bf16 %v563, %v562
  %v579 = vpack.c.bf16 %v565, %v564
  %v580 = vpack.c.bf16 %v567, %v566
  %v581 = vpack.c.bf16 %v569, %v568
  %v582 = vpack.c.bf16 %v571, %v570
  %v583 = vpack.c.bf16 %v573, %v572
  %v584 = vpack.c.bf16 %v575, %v574
  %v585 = vpack.c.bf16 %v577, %v576
  %v586 = vld [vmem:[%s5] sm:$0xf]
  %v587 = vld [vmem:[%s5 + $0x4] sm:$0xf]
  %v588 = vld [vmem:[%s5 + $0x8] sm:$0xf]
  %v589 = vld [vmem:[%s5 + $0xc] sm:$0xf]
  %v590 = vld [vmem:[%s5 + $0x10] sm:$0xf]
  %v591 = vld [vmem:[%s5 + $0x14] sm:$0xf]
  %v592 = vld [vmem:[%s5 + $0x18] sm:$0xf]
  %v593 = vld [vmem:[%s5 + $0x1c] sm:$0xf]
  %v594 = vld [vmem:[%s5 + $0x20] sm:$0xf]
  %v595 = vld [vmem:[%s5 + $0x24] sm:$0xf]
  %v596 = vld [vmem:[%s5 + $0x28] sm:$0xf]
  %v597 = vld [vmem:[%s5 + $0x2c] sm:$0xf]
  %v598 = vld [vmem:[%s5 + $0x30] sm:$0xf]
  %v599 = vld [vmem:[%s5 + $0x34] sm:$0xf]
  %v600 = vld [vmem:[%s5 + $0x38] sm:$0xf]
  %v601 = vld [vmem:[%s5 + $0x3c] sm:$0xf]
  %v602 = vld [vmem:[%s6] sm:$0x1]
  %v604 = vlaneseq
  %v605 = vshrl.u32 %v604, 7
  %v606 = vsub.s32 0, %v605
  %v607 = vrot.slane %v602, %v606
  %v625 = vunpack.c.l.b16 %v586
  %v626 = vunpack.c.l.b16 %v587
  %v627 = vunpack.c.l.b16 %v588
  %v628 = vunpack.c.l.b16 %v589
  %v629 = vunpack.c.l.b16 %v590
  %v630 = vunpack.c.l.b16 %v591
  %v631 = vunpack.c.l.b16 %v592
  %v632 = vunpack.c.l.b16 %v593
  %v633 = vunpack.c.l.b16 %v594
  %v634 = vunpack.c.l.b16 %v595
  %v635 = vunpack.c.l.b16 %v596
  %v636 = vunpack.c.l.b16 %v597
  %v637 = vunpack.c.l.b16 %v598
  %v638 = vunpack.c.l.b16 %v599
  %v639 = vunpack.c.l.b16 %v600
  %v640 = vunpack.c.l.b16 %v601
  %v641 = vpack.c.b16 %v626, %v625
  %v642 = vpack.c.b16 %v628, %v627
  %v643 = vpack.c.b16 %v630, %v629
  %v644 = vpack.c.b16 %v632, %v631
  %v645 = vpack.c.b16 %v634, %v633
  %v646 = vpack.c.b16 %v636, %v635
  %v647 = vpack.c.b16 %v638, %v637
  %v648 = vpack.c.b16 %v640, %v639
  %657 = vmatprep.subr.bf16.mxu0 0
  %658 = vmatpush1.bf16.msra.mxu0 %v641
  %659 = vmatprep.subr.bf16.mxu0 0
  %660 = vmatpush1.bf16.msra.mxu0 %v642
  %661 = vmatprep.subr.bf16.mxu0 0
  %662 = vmatpush1.bf16.msra.mxu0 %v643
  %663 = vmatprep.subr.bf16.mxu0 0
  %664 = vmatpush1.bf16.msra.mxu0 %v644
  %665 = vmatprep.subr.bf16.mxu0 0
  %666 = vmatpush1.bf16.msra.mxu0 %v645
  %667 = vmatprep.subr.bf16.mxu0 0
  %668 = vmatpush1.bf16.msra.mxu0 %v646
  %669 = vmatprep.subr.bf16.mxu0 0
  %670 = vmatpush1.bf16.msra.mxu0 %v647
  %671 = vmatprep.subr.bf16.mxu0 0
  %672 = vmatpush1.bf16.msra.mxu0 %v648
  %673 = vmatprep.subr.bf16.mxu0 0
  %674 = vmatpush1.bf16.msra.mxu0 0
  %675 = vmatprep.subr.bf16.mxu0 0
  %676 = vmatpush1.bf16.msra.mxu0 0
  %677 = vmatprep.subr.bf16.mxu0 0
  %678 = vmatpush1.bf16.msra.mxu0 0
  %679 = vmatprep.subr.bf16.mxu0 0
  %680 = vmatpush1.bf16.msra.mxu0 0
  %681 = vmatprep.subr.bf16.mxu0 0
  %682 = vmatpush1.bf16.msra.mxu0 0
  %683 = vmatprep.subr.bf16.mxu0 0
  %684 = vmatpush1.bf16.msra.mxu0 0
  %685 = vmatprep.subr.bf16.mxu0 0
  %686 = vmatpush1.bf16.msra.mxu0 0
  %687 = vmatprep.subr.bf16.mxu0 0
  %688 = vmatpush1.bf16.msra.mxu0 0
  %689 = vmatprep.mubr.bf16.mxu0 0
  %690 = vmatmul.mubr.bf16.gmra.mrb[0].mxu0 %v578
  %v691 = vpop.f32.mrb[0].mxu0
  %v692 = vadd.f32 %v607, %v691
  %v693 = vpop.f32.mrb[0].mxu0
  %v694 = vpop.f32.mrb[0].mxu0
  %v695 = vadd.f32 %v607, %v694
  %v696 = vpop.f32.mrb[0].mxu0
  %697 = vmatprep.mubr.bf16.mxu0 0
  %698 = vmatmul.mubr.bf16.gmra.mrb[0].mxu0 %v579
  %v699 = vpop.f32.mrb[0].mxu0
  %v700 = vadd.f32 %v607, %v699
  %v701 = vpop.f32.mrb[0].mxu0
  %v702 = vpop.f32.mrb[0].mxu0
  %v703 = vadd.f32 %v607, %v702
  %v704 = vpop.f32.mrb[0].mxu0
  %705 = vmatprep.mubr.bf16.mxu0 0
  %706 = vmatmul.mubr.bf16.gmra.mrb[0].mxu0 %v580
  %v707 = vpop.f32.mrb[0].mxu0
  %v708 = vadd.f32 %v607, %v707
  %v709 = vpop.f32.mrb[0].mxu0
  %v710 = vpop.f32.mrb[0].mxu0
  %v711 = vadd.f32 %v607, %v710
  %v712 = vpop.f32.mrb[0].mxu0
  %713 = vmatprep.mubr.bf16.mxu0 0
  %714 = vmatmul.mubr.bf16.gmra.mrb[0].mxu0 %v581
  %v715 = vpop.f32.mrb[0].mxu0
  %v716 = vadd.f32 %v607, %v715
  %v717 = vpop.f32.mrb[0].mxu0
  %v718 = vpop.f32.mrb[0].mxu0
  %v719 = vadd.f32 %v607, %v718
  %v720 = vpop.f32.mrb[0].mxu0
  %721 = vmatprep.mubr.bf16.mxu0 0
  %722 = vmatmul.mubr.bf16.gmra.mrb[0].mxu0 %v582
  %v723 = vpop.f32.mrb[0].mxu0
  %v724 = vadd.f32 %v607, %v723
  %v725 = vpop.f32.mrb[0].mxu0
  %v726 = vpop.f32.mrb[0].mxu0
  %v727 = vadd.f32 %v607, %v726
  %v728 = vpop.f32.mrb[0].mxu0
  %729 = vmatprep.mubr.bf16.mxu0 0
  %730 = vmatmul.mubr.bf16.gmra.mrb[0].mxu0 %v583
  %v731 = vpop.f32.mrb[0].mxu0
  %v732 = vadd.f32 %v607, %v731
  %v733 = vpop.f32.mrb[0].mxu0
  %v734 = vpop.f32.mrb[0].mxu0
  %v735 = vadd.f32 %v607, %v734
  %v736 = vpop.f32.mrb[0].mxu0
  %737 = vmatprep.mubr.bf16.mxu0 0
  %738 = vmatmul.mubr.bf16.gmra.mrb[0].mxu0 %v584
  %v739 = vpop.f32.mrb[0].mxu0
  %v740 = vadd.f32 %v607, %v739
  %v741 = vpop.f32.mrb[0].mxu0
  %v742 = vpop.f32.mrb[0].mxu0
  %v743 = vadd.f32 %v607, %v742
  %v744 = vpop.f32.mrb[0].mxu0
  %745 = vmatprep.mubr.bf16.mxu0 0
  %746 = vmatmul.mubr.bf16.gmra.mrb[0].mxu0 %v585
  %v747 = vpop.f32.mrb[0].mxu0
  %v748 = vadd.f32 %v607, %v747
  %v749 = vpop.f32.mrb[0].mxu0
  %v750 = vpop.f32.mrb[0].mxu0
  %v751 = vadd.f32 %v607, %v750
  %v752 = vpop.f32.mrb[0].mxu0
  %753 = vdwg.mxu0
  %v754 = vmax.f32 %v692, 0.0
  %v755 = vmax.f32 %v695, 0.0
  %v756 = vmax.f32 %v700, 0.0
  %v757 = vmax.f32 %v703, 0.0
  %v758 = vmax.f32 %v708, 0.0
  %v759 = vmax.f32 %v711, 0.0
  %v760 = vmax.f32 %v716, 0.0
  %v761 = vmax.f32 %v719, 0.0
  %v762 = vmax.f32 %v724, 0.0
  %v763 = vmax.f32 %v727, 0.0
  %v764 = vmax.f32 %v732, 0.0
  %v765 = vmax.f32 %v735, 0.0
  %v766 = vmax.f32 %v740, 0.0
  %v767 = vmax.f32 %v743, 0.0
  %v768 = vmax.f32 %v748, 0.0
  %v769 = vmax.f32 %v751, 0.0
  %v770 = vld [vmem:[%s7] sm:$0x1]
  %v771 = vld [vmem:[#allocation2] sm:$0x1]
  %773 = vset.pattern.permute.xlu0 0
  %774 = vperm.xlu0 %773, %v771
  %v775 = vpop.permute.xlu0 %774
  %v777 = vlaneseq
  %v778 = vshrl.u32 %v777, 7
  %v779 = vsub.s32 0, %v778
  %v780 = vrot.slane %v775, %v779
  %vm781 = vcmask 523264
  %v783 = vsel %vm781, %v770, 0
  %v786 = vsel %vm781, %v754, 0
  %v789 = vsel %vm781, %v755, 0
  %v792 = vsel %vm781, %v756, 0
  %v795 = vsel %vm781, %v757, 0
  %v798 = vsel %vm781, %v758, 0
  %v801 = vsel %vm781, %v759, 0
  %v804 = vsel %vm781, %v760, 0
  %v807 = vsel %vm781, %v761, 0
  %v810 = vsel %vm781, %v762, 0
  %v813 = vsel %vm781, %v763, 0
  %v816 = vsel %vm781, %v764, 0
  %v819 = vsel %vm781, %v765, 0
  %v822 = vsel %vm781, %v766, 0
  %v825 = vsel %vm781, %v767, 0
  %v828 = vsel %vm781, %v768, 0
  %v831 = vsel %vm781, %v769, 0
  %833 = vmatprep.subr.mxu0 0.0
  %834 = vmatpush1.xpose.msra.mxu0 %v786
  %835 = vmatprep.subr.mxu0 0.0
  %836 = vmatpush1.xpose.msra.mxu0 %v789
  %837 = vmatprep.subr.mxu0 0.0
  %838 = vmatpush1.xpose.msra.mxu0 %v792
  %839 = vmatprep.subr.mxu0 0.0
  %840 = vmatpush1.xpose.msra.mxu0 %v795
  %841 = vmatprep.subr.mxu0 0.0
  %842 = vmatpush1.xpose.msra.mxu0 %v798
  %843 = vmatprep.subr.mxu0 0.0
  %844 = vmatpush1.xpose.msra.mxu0 %v801
  %845 = vmatprep.subr.mxu0 0.0
  %846 = vmatpush1.xpose.msra.mxu0 %v804
  %847 = vmatprep.subr.mxu0 0.0
  %848 = vmatpush1.xpose.msra.mxu0 %v807
  %849 = vmatprep.subr.mxu0 0.0
  %850 = vmatpush1.xpose.msra.mxu0 %v810
  %851 = vmatprep.subr.mxu0 0.0
  %852 = vmatpush1.xpose.msra.mxu0 %v813
  %853 = vmatprep.subr.mxu0 0.0
  %854 = vmatpush1.xpose.msra.mxu0 %v816
  %855 = vmatprep.subr.mxu0 0.0
  %856 = vmatpush1.xpose.msra.mxu0 %v819
  %857 = vmatprep.subr.mxu0 0.0
  %858 = vmatpush1.xpose.msra.mxu0 %v822
  %859 = vmatprep.subr.mxu0 0.0
  %860 = vmatpush1.xpose.msra.mxu0 %v825
  %861 = vmatprep.subr.mxu0 0.0
  %862 = vmatpush1.xpose.msra.mxu0 %v828
  %863 = vmatprep.subr.mxu0 0.0
  %864 = vmatpush1.xpose.msra.mxu0 %v831
  %865 = vmatprep.subr.mxu0 0.0
  %866 = vmatpush1.xpose.msra.mxu0 0.0
  %867 = vmatprep.subr.mxu0 0.0
  %868 = vmatpush1.xpose.msra.mxu0 0.0
  %869 = vmatprep.subr.mxu0 0.0
  %870 = vmatpush1.xpose.msra.mxu0 0.0
  %871 = vmatprep.subr.mxu0 0.0
  %872 = vmatpush1.xpose.msra.mxu0 0.0
  %873 = vmatprep.subr.mxu0 0.0
  %874 = vmatpush1.xpose.msra.mxu0 0.0
  %875 = vmatprep.subr.mxu0 0.0
  %876 = vmatpush1.xpose.msra.mxu0 0.0
  %877 = vmatprep.subr.mxu0 0.0
  %878 = vmatpush1.xpose.msra.mxu0 0.0
  %879 = vmatprep.subr.mxu0 0.0
  %880 = vmatpush1.xpose.msra.mxu0 0.0
  %881 = vmatprep.subr.mxu0 0.0
  %882 = vmatpush1.xpose.msra.mxu0 0.0
  %883 = vmatprep.subr.mxu0 0.0
  %884 = vmatpush1.xpose.msra.mxu0 0.0
  %885 = vmatprep.subr.mxu0 0.0
  %886 = vmatpush1.xpose.msra.mxu0 0.0
  %887 = vmatprep.subr.mxu0 0.0
  %888 = vmatpush1.xpose.msra.mxu0 0.0
  %889 = vmatprep.subr.mxu0 0.0
  %890 = vmatpush1.xpose.msra.mxu0 0.0
  %891 = vmatprep.subr.mxu0 0.0
  %892 = vmatpush1.xpose.msra.mxu0 0.0
  %893 = vmatprep.subr.mxu0 0.0
  %894 = vmatpush1.xpose.msra.mxu0 0.0
  %895 = vmatprep.subr.mxu0 0.0
  %896 = vmatpush1.xpose.msra.mxu0 0.0
  %897 = vmatprep.mubr.f32.mxu0 0.0
  %898 = vmatmul.mubr.f32.gmra.mrb[0].mxu0 %v783
  %v899 = vpop.f32.mrb[0].mxu0
  %v900 = vadd.f32 %v780, %v899
  %v901 = vpop.f32.mrb[0].mxu0
  %902 = vdwg.mxu0
  %v903 = vsub.f32 0.0, %v900
  %v904 = vmul.f32 %v903, 1.442695
  %v905 = vpow.pop %v904
  %v906 = vadd.f32 %v905, 1.0
  %v907 = vrcp.pop %v906
  %v908 = vmul.f32 1.0, %v907
  %909 = vst [vmem:[%s9] sm:$0x1] %v908
  // Predicated region
  $region38: #{forward.1} parent=0 // pred_check
    _
  $region39: #{forward.1} parent=0 // pred_check_branch
    %911 = sbr.rel (0) target = $region41
  $region40: #{forward.1} parent=0 // pred_region
    _
  $region41: #{forward.1} parent=0 // pred_fallthru
    _
  // Predicated region
  $region42: #{forward.1} parent=0 // pred_check
    _
  $region43: #{forward.1} parent=0 // pred_check_branch
    %913 = sbr.rel (0) target = $region45
  $region44: #{forward.1} parent=0 // pred_region
    _
  $region45: #{forward.1} parent=0 // pred_fallthru
    _

</llo_original>
